<compile_context>
chip_gen: v6e
topology: v6e:2x2x1
jax: 0.10.0
libtpu: 0.0.40
codegen_flags: <defaults>
</compile_context>

<pallas_src>
import functools
import math

import jax
import jax.numpy as jnp
from jax import lax
from jax.experimental import pallas as pl
from jax.experimental.pallas import tpu as pltpu

# 48 MiB scoped VMEM: < 64 MiB physical on v7x, leaves double-buffer headroom everywhere.
_VMEM_LIMIT = 48 * 1024 * 1024
_BN_EPS = 1e-5


# ----------------------------------------------------------------------------
# Pallas kernels
# ----------------------------------------------------------------------------
def _conv_bn_stats_kernel(x_ref, w_ref, o_ref, ps_ref, pq_ref, acc_ref, *,
                          kw, stride, ow):
    """One output row of a conv.  Grid = (N, OH, KH); KH is the reduction axis.

    x_ref : (S, 1, Wq, Cin)  padded/phase-split input row(s)   (bf16)
    w_ref : (KH*KW, Cin, Cout) full weight, VMEM-resident       (bf16)
    o_ref : (1, 1, OW, Cout) output row                         (bf16)
    ps/pq : (1, 1, 1, Cout)  per-row sum / sum-of-squares       (f32)
    acc   : (OWP, Cout) f32 scratch accumulator (OWP = max(OW, 8))
    """
    ki = pl.program_id(2)

    @pl.when(ki == 0)
    def _init():
        acc_ref[...] = jnp.zeros_like(acc_ref)

    owp = acc_ref.shape[0]
    acc = acc_ref[...]
    for kj in range(kw):                     # KW taps: slices of the resident row
        pj, qj = kj % stride, kj // stride
        lhs = x_ref[pj, 0, pl.ds(qj, owp), :]          # (OWP, Cin)
        acc = acc + jnp.dot(lhs, w_ref[ki * kw + kj],
                            preferred_element_type=jnp.float32)
    acc_ref[...] = acc

    @pl.when(ki == pl.num_programs(2) - 1)
    def _store():
        res = acc_ref[0:ow, :]
        o_ref[0, 0] = res.astype(o_ref.dtype)
        ps_ref[0, 0] = jnp.sum(res, axis=0, keepdims=True)
        pq_ref[0, 0] = jnp.sum(res * res, axis=0, keepdims=True)


def _maxpool_kernel(x_ref, o_ref, acc_ref, *, kw, stride, ow):
    """MaxPool, same row-streaming structure as the conv (grid = (N, OH, KH))."""
    ki = pl.program_id(2)

    @pl.when(ki == 0)
    def _init():
        acc_ref[...] = jnp.full(acc_ref.shape, -jnp.inf, acc_ref.dtype)

    owp = acc_ref.shape[0]
    acc = acc_ref[...]
    for kj in range(kw):
        pj, qj = kj % stride, kj // stride
        acc = jnp.maximum(acc, x_ref[pj, 0, pl.ds(qj, owp), :])
    acc_ref[...] = acc

    @pl.when(ki == pl.num_programs(2) - 1)
    def _store():
        o_ref[0, 0] = acc_ref[0:ow, :].astype(o_ref.dtype)


def _bn_apply_kernel(x_ref, s1_ref, b1_ref, *rest, relu, res_mode):
    """y = x*scale1+shift1 [+ res | + res*scale2+shift2] [relu].  Row-tiled."""
    if res_mode == 0:
        (o_ref,) = rest
    elif res_mode == 1:
        r_ref, o_ref = rest
    else:
        r_ref, s2_ref, b2_ref, o_ref = rest
    y = x_ref[...].astype(jnp.float32) * s1_ref[...] + b1_ref[...]
    if res_mode == 1:
        y = y + r_ref[...].astype(jnp.float32)
    elif res_mode == 2:
        y = y + r_ref[...].astype(jnp.float32) * s2_ref[...] + b2_ref[...]
    if relu:
        y = jnp.maximum(y, 0.0)
    o_ref[...] = y.astype(o_ref.dtype)


def _matmul_bias_act_kernel(x_ref, w_ref, b_ref, o_ref, *, act):
    acc = jnp.dot(x_ref[...], w_ref[...], preferred_element_type=jnp.float32)
    acc = acc + b_ref[...]
    if act == "relu":
        acc = jnp.maximum(acc, 0.0)
    elif act == "gelu":  # exact (erf) GELU == torch.nn.GELU() default
        acc = 0.5 * acc * (1.0 + lax.erf(acc * (1.0 / math.sqrt(2.0))))
    o_ref[...] = acc.astype(o_ref.dtype)


def _global_avgpool_kernel(x_ref, o_ref, *, inv_hw):
    s = jnp.sum(x_ref[0].astype(jnp.float32), axis=0, keepdims=True)
    o_ref[0] = s * inv_hw


def _l2_normalize_kernel(x_ref, o_ref):
    x = x_ref[...]
    n = jnp.sqrt(jnp.sum(x * x, axis=-1, keepdims=True))
    o_ref[...] = x / jnp.maximum(n, 1e-12)  # F.normalize(dim=-1, eps=1e-12)


# ----------------------------------------------------------------------------
# Helpers
# ----------------------------------------------------------------------------
def _pick_row_tile(rows, cols, elem_bytes, mult=8, budget_bytes=2 * 1024 * 1024):
    """Largest divisor of `rows` that is a multiple of `mult` and fits the budget.
    Falls back to the full array (single block) for tiny inputs."""
    target = max(mult, budget_bytes // max(1, cols * elem_bytes))
    t = min(rows, target)
    t -= t % mult
    while t >= mult:
        if rows % t == 0:
            return t
        t -= mult
    return rows


def _prep_rows(x4, kh, kw, stride, pad, pad_value, owp):
    """Pad + column-phase-split an NHWC tensor for the row-streaming kernels.

    Returns (x_prep, S, Wq) with x_prep of shape (N*S, Hp, Wq, C): for batch n and
    column phase p, row h lives at x_prep[n*S + p, h].  Guarantees that a full
    `owp`-row LHS tile can be loaded in-bounds for every kernel column tap.
    """
    N, H, W, C = x4.shape
    if pad > 0:
        x4 = jnp.pad(x4, ((0, 0), (pad, pad), (pad, pad), (0, 0)),
                     constant_values=pad_value)
    Hp, Wp = H + 2 * pad, W + 2 * pad
    if stride == 1:
        xph, S, Wq = x4, 1, Wp
    elif kw == 1:                                # 1x1 strided conv: only phase 0 needed
        xph = x4[:, :, ::stride, :]
        S, Wq = 1, xph.shape[2]
    else:
        Wq = -(-Wp // stride)
        if Wq * stride != Wp:
            x4 = jnp.pad(x4, ((0, 0), (0, 0), (0, Wq * stride - Wp), (0, 0)),
                         constant_values=pad_value)
        xph = x4.reshape(N, Hp, Wq, stride, C).transpose(0, 3, 1, 2, 4)
        xph = xph.reshape(N * stride, Hp, Wq, C)
        S = stride
    extra = (kw - 1) // stride + owp - Wq
    if extra > 0:
        xph = jnp.pad(xph, ((0, 0), (0, 0), (0, extra), (0, 0)),
                      constant_values=pad_value)
        Wq += extra
    return xph, S, Wq


def _bn_scale_shift(stats, gamma, beta, eps=_BN_EPS):
    """Finalize the fused partial sums into per-channel scale/shift (tiny JAX)."""
    psum, psq, count = stats
    s = jnp.sum(psum, axis=(0, 1, 2))
    sq = jnp.sum(psq, axis=(0, 1, 2))
    mean = s / count
    var = jnp.maximum(sq / count - mean * mean, 0.0)   # biased var (train-mode BN)
    scale = gamma.reshape(-1).astype(jnp.float32) * lax.rsqrt(var + eps)
    shift = beta.reshape(-1).astype(jnp.float32) - mean * scale
    return scale.reshape(1, -1), shift.reshape(1, -1)


# ----------------------------------------------------------------------------
# pallas_call wrappers
# ----------------------------------------------------------------------------
def conv2d_bn_stats(x4, w, stride, pad):
    """Direct NHWC conv (no bias) with BN sum/sumsq fused into the epilogue.

    x4: (N,H,W,Cin), w: (KH,KW,Cin,Cout).  Returns (y bf16 NHWC, (psum, psq, count)).
    """
    kh, kw, cin, cout = w.shape
    N, H, W, _ = x4.shape
    OH = (H + 2 * pad - kh) // stride + 1
    OW = (W + 2 * pad - kw) // stride + 1
    OWP = max(OW, 8)                         # keep the MXU LHS >= 8 sublanes
    x4 = x4.astype(jnp.bfloat16)
    xp, S, Wq = _prep_rows(x4, kh, kw, stride, pad, 0.0, OWP)
    wf = w.astype(jnp.bfloat16).reshape(kh * kw, cin, cout)

    kernel = functools.partial(_conv_bn_stats_kernel, kw=kw, stride=stride, ow=OW)
    y, psum, psq = pl.pallas_call(
        kernel,
        out_shape=(
            jax.ShapeDtypeStruct((N, OH, OW, cout), jnp.bfloat16),
            jax.ShapeDtypeStruct((N, OH, 1, cout), jnp.float32),
            jax.ShapeDtypeStruct((N, OH, 1, cout), jnp.float32),
        ),
        grid_spec=pltpu.PrefetchScalarGridSpec(
            num_scalar_prefetch=0,
            grid=(N, OH, kh),
            in_specs=[
                pl.BlockSpec((S, 1, Wq, cin),
                             lambda n, oh, ki: (n, oh * stride + ki, 0, 0)),
                # constant index map -> weight fetched once, stays VMEM-resident
                pl.BlockSpec((kh * kw, cin, cout), lambda n, oh, ki: (0, 0, 0)),
            ],
            out_specs=[
                pl.BlockSpec((1, 1, OW, cout), lambda n, oh, ki: (n, oh, 0, 0)),
                pl.BlockSpec((1, 1, 1, cout), lambda n, oh, ki: (n, oh, 0, 0)),
                pl.BlockSpec((1, 1, 1, cout), lambda n, oh, ki: (n, oh, 0, 0)),
            ],
            scratch_shapes=[pltpu.VMEM((OWP, cout), jnp.float32)],
        ),
        compiler_params=pltpu.CompilerParams(
            dimension_semantics=("parallel", "parallel", "arbitrary"),
            vmem_limit_bytes=_VMEM_LIMIT,
        ),
    )(xp, wf)
    return y, (psum, psq, float(N * OH * OW))


def maxpool_3x3_s2_p1(x4):
    N, H, W, C = x4.shape
    kh = kw = 3
    stride, pad = 2, 1
    OH = (H + 2 * pad - kh) // stride + 1
    OW = (W + 2 * pad - kw) // stride + 1
    OWP = max(OW, 8)
    x4 = x4.astype(jnp.bfloat16)
    xp, S, Wq = _prep_rows(x4, kh, kw, stride, pad, -jnp.inf, OWP)

    kernel = functools.partial(_maxpool_kernel, kw=kw, stride=stride, ow=OW)
    return pl.pallas_call(
        kernel,
        out_shape=jax.ShapeDtypeStruct((N, OH, OW, C), jnp.bfloat16),
        grid_spec=pltpu.PrefetchScalarGridSpec(
            num_scalar_prefetch=0,
            grid=(N, OH, kh),
            in_specs=[pl.BlockSpec((S, 1, Wq, C),
                                   lambda n, oh, ki: (n, oh * stride + ki, 0, 0))],
            out_specs=pl.BlockSpec((1, 1, OW, C), lambda n, oh, ki: (n, oh, 0, 0)),
            scratch_shapes=[pltpu.VMEM((OWP, C), jnp.bfloat16)],
        ),
        compiler_params=pltpu.CompilerParams(
            dimension_semantics=("parallel", "parallel", "arbitrary"),
            vmem_limit_bytes=_VMEM_LIMIT,
        ),
    )(xp)


def bn_apply(y4, stats, gamma, beta, relu=True, residual=None,
             res_stats=None, res_gamma=None, res_beta=None):
    """Training-mode BN apply (+optional residual with its own BN) (+ReLU), tiled."""
    N, OH, OW, C = y4.shape
    scale1, shift1 = _bn_scale_shift(stats, gamma, beta)
    res_mode = 0
    scale2 = shift2 = None
    if residual is not None:
        if res_stats is not None:
            res_mode = 2
            scale2, shift2 = _bn_scale_shift(res_stats, res_gamma, res_beta)
        else:
            res_mode = 1

    M = N * OH * OW
    x2 = y4.reshape(M, C)
    r2 = residual.reshape(M, C).astype(jnp.bfloat16) if residual is not None else None

    # lane-densify C==64 layers: (rows, 64) -> (rows/2, 128), per-channel params tiled.
    if C == 64 and M % 2 == 0:
        R, Cl = M // 2, 128
        x2 = x2.reshape(R, Cl)
        if r2 is not None:
            r2 = r2.reshape(R, Cl)
        scale1, shift1 = jnp.tile(scale1, (1, 2)), jnp.tile(shift1, (1, 2))
        if res_mode == 2:
            scale2, shift2 = jnp.tile(scale2, (1, 2)), jnp.tile(shift2, (1, 2))
    else:
        R, Cl = M, C

    TR = _pick_row_tile(R, Cl, 2, mult=16)

    inputs = [x2, scale1, shift1]
    in_specs = [pl.BlockSpec((TR, Cl), lambda i: (i, 0)),
                pl.BlockSpec((1, Cl), lambda i: (0, 0)),
                pl.BlockSpec((1, Cl), lambda i: (0, 0))]
    if res_mode >= 1:
        inputs.append(r2)
        in_specs.append(pl.BlockSpec((TR, Cl), lambda i: (i, 0)))
    if res_mode == 2:
        inputs += [scale2, shift2]
        in_specs += [pl.BlockSpec((1, Cl), lambda i: (0, 0)),
                     pl.BlockSpec((1, Cl), lambda i: (0, 0))]

    out = pl.pallas_call(
        functools.partial(_bn_apply_kernel, relu=relu, res_mode=res_mode),
        out_shape=jax.ShapeDtypeStruct((R, Cl), jnp.bfloat16),
        grid_spec=pltpu.PrefetchScalarGridSpec(
            num_scalar_prefetch=0,
            grid=(R // TR,),
            in_specs=in_specs,
            out_specs=pl.BlockSpec((TR, Cl), lambda i: (i, 0)),
        ),
        compiler_params=pltpu.CompilerParams(dimension_semantics=("parallel",)),
    )(*inputs)
    return out.reshape(N, OH, OW, C)


def global_avgpool(x4):
    N, H, W, C = x4.shape
    HW = H * W
    x3 = x4.reshape(N, HW, C)
    out = pl.pallas_call(
        functools.partial(_global_avgpool_kernel, inv_hw=1.0 / HW),
        out_shape=jax.ShapeDtypeStruct((N, 1, C), jnp.float32),
        grid_spec=pltpu.PrefetchScalarGridSpec(
            num_scalar_prefetch=0,
            grid=(N,),
            in_specs=[pl.BlockSpec((1, HW, C), lambda n: (n, 0, 0))],
            out_specs=pl.BlockSpec((1, 1, C), lambda n: (n, 0, 0)),
        ),
        compiler_params=pltpu.CompilerParams(dimension_semantics=("parallel",)),
    )(x3)
    return out.reshape(N, C)


def matmul_bias_act(x, w, b=None, act="none"):
    """act((x @ w) + b): bf16 MXU matmul, f32 accumulation, (TM, TN) gridded."""
    M, K = x.shape
    _, Nout = w.shape
    x = x.astype(jnp.bfloat16)
    w = w.astype(jnp.bfloat16)
    b = (jnp.zeros((1, Nout), jnp.float32) if b is None
         else b.reshape(1, Nout).astype(jnp.float32))

    if M >= 128:
        TM = 128
        Mp = ((M + TM - 1) // TM) * TM
    else:
        TM = max(8, ((M + 7) // 8) * 8)
        Mp = TM
    if Mp != M:
        x = jnp.pad(x, ((0, Mp - M), (0, 0)))
    TN = 256 if Nout % 256 == 0 else (128 if Nout % 128 == 0 else Nout)
    # TODO(synk): K stays untiled (K <= 512 in the DINO head); tile K for larger GEMMs.

    out = pl.pallas_call(
        functools.partial(_matmul_bias_act_kernel, act=act),
        out_shape=jax.ShapeDtypeStruct((Mp, Nout), jnp.float32),
        grid_spec=pltpu.PrefetchScalarGridSpec(
            num_scalar_prefetch=0,
            grid=(Mp // TM, Nout // TN),
            in_specs=[pl.BlockSpec((TM, K), lambda i, j: (i, 0)),
                      pl.BlockSpec((K, TN), lambda i, j: (0, j)),
                      pl.BlockSpec((1, TN), lambda i, j: (0, j))],
            out_specs=pl.BlockSpec((TM, TN), lambda i, j: (i, j)),
        ),
        compiler_params=pltpu.CompilerParams(
            dimension_semantics=("parallel", "parallel"),
            vmem_limit_bytes=_VMEM_LIMIT,
        ),
    )(x, w, b)
    return out[:M] if Mp != M else out


def l2_normalize(x):
    R, C = x.shape
    x = x.astype(jnp.float32)
    TR = _pick_row_tile(R, C, 4, mult=8)
    return pl.pallas_call(
        _l2_normalize_kernel,
        out_shape=jax.ShapeDtypeStruct((R, C), jnp.float32),
        grid_spec=pltpu.PrefetchScalarGridSpec(
            num_scalar_prefetch=0,
            grid=(R // TR,),
            in_specs=[pl.BlockSpec((TR, C), lambda i: (i, 0))],
            out_specs=pl.BlockSpec((TR, C), lambda i: (i, 0)),
        ),
        compiler_params=pltpu.CompilerParams(dimension_semantics=("parallel",)),
    )(x)


# ----------------------------------------------------------------------------
# ResNet18 backbone (children()[:-1]) + DINO projection head
# ----------------------------------------------------------------------------
def basic_block(x, p):
    s = p["stride"]
    c1, st1 = conv2d_bn_stats(x, p["conv1_w"], stride=s, pad=1)
    a1 = bn_apply(c1, st1, p["bn1_g"], p["bn1_b"], relu=True)
    c2, st2 = conv2d_bn_stats(a1, p["conv2_w"], stride=1, pad=1)
    if "ds_w" in p:
        d, std = conv2d_bn_stats(x, p["ds_w"], stride=s, pad=0)
        # bn2 + downsample-BN + add + ReLU fused in a single elementwise pass
        return bn_apply(c2, st2, p["bn2_g"], p["bn2_b"], relu=True,
                        residual=d, res_stats=std,
                        res_gamma=p["ds_g"], res_beta=p["ds_b"])
    return bn_apply(c2, st2, p["bn2_g"], p["bn2_b"], relu=True, residual=x)


def backbone_forward(x_nhwc, bp):
    y, st = conv2d_bn_stats(x_nhwc, bp["conv1_w"], stride=2, pad=3)
    y = bn_apply(y, st, bp["bn1_g"], bp["bn1_b"], relu=True)
    y = maxpool_3x3_s2_p1(y)
    for layer in ("layer1", "layer2", "layer3", "layer4"):
        for blk in bp[layer]:
            y = basic_block(y, blk)
    return global_avgpool(y)  # AdaptiveAvgPool2d((1,1)) + flatten(start_dim=1)


def dino_head_forward(y, hp):
    h = matmul_bias_act(y, hp["w1"], hp["b1"], act="gelu")
    h = matmul_bias_act(h, hp["w2"], hp["b2"], act="gelu")
    h = matmul_bias_act(h, hp["w3"], hp["b3"], act="none")
    h = l2_normalize(h)
    # weight_norm'd last Linear(64 -> 2048, bias=False): W_eff = g * V/||V||, g frozen to 1.
    # Input-independent (plain JAX, hoisted out of the Pallas matmul; folds to a const under jit).
    v = hp["w_last"]
    w_eff = v * lax.rsqrt(jnp.sum(v * v, axis=0, keepdims=True))
    return matmul_bias_act(h, w_eff, None, act="none")


def dino_forward(params, x_nchw):
    x = jnp.transpose(x_nchw, (0, 2, 3, 1)).astype(jnp.bfloat16)  # NCHW -> NHWC
    y = backbone_forward(x, params["backbone"])                    # (N, 512) f32
    return dino_head_forward(y, params["head"])                    # (N, 2048) f32


# ----------------------------------------------------------------------------
# Deterministic parameter init (shapes from resnet18 + DINOProjectionHead)
# ----------------------------------------------------------------------------
def init_params(key):
    keys = iter(jax.random.split(key, 64))

    def conv_w(kh, kw, cin, cout):
        fan_in = kh * kw * cin
        return (jax.random.normal(next(keys), (kh, kw, cin, cout), jnp.float32)
                * math.sqrt(2.0 / fan_in))

    def bn(c):
        return jnp.ones((1, c), jnp.float32), jnp.zeros((1, c), jnp.float32)

    def block(cin, cout, stride):
        p = {"stride": stride,
             "conv1_w": conv_w(3, 3, cin, cout),
             "conv2_w": conv_w(3, 3, cout, cout)}
        p["bn1_g"], p["bn1_b"] = bn(cout)
        p["bn2_g"], p["bn2_b"] = bn(cout)
        if stride != 1 or cin != cout:
            p["ds_w"] = conv_w(1, 1, cin, cout)
            p["ds_g"], p["ds_b"] = bn(cout)
        return p

    backbone = {"conv1_w": conv_w(7, 7, 3, 64)}
    backbone["bn1_g"], backbone["bn1_b"] = bn(64)
    backbone["layer1"] = [block(64, 64, 1), block(64, 64, 1)]
    backbone["layer2"] = [block(64, 128, 2), block(128, 128, 1)]
    backbone["layer3"] = [block(128, 256, 2), block(256, 256, 1)]
    backbone["layer4"] = [block(256, 512, 2), block(512, 512, 1)]

    def lin(cin, cout):
        return (jax.random.normal(next(keys), (cin, cout), jnp.float32) * 0.02,
                jnp.zeros((1, cout), jnp.float32))

    head = {}
    head["w1"], head["b1"] = lin(512, 512)   # Linear(512, 512) + GELU
    head["w2"], head["b2"] = lin(512, 512)   # Linear(512, 512) + GELU
    head["w3"], head["b3"] = lin(512, 64)    # Linear(512, 64)
    head["w_last"] = jax.random.normal(next(keys), (64, 2048), jnp.float32) * 0.02
    return {"backbone": backbone, "head": head}


# ----------------------------------------------------------------------------
if __name__ == "__main__":
    key = jax.random.PRNGKey(0)
    pkey, xkey = jax.random.split(key)
    params = init_params(pkey)
    # Small input consistent with the module: NCHW, 3 channels, 32x32 (ResNet needs /32)
    x = jax.random.normal(xkey, (2, 3, 32, 32), jnp.float32)
    z = dino_forward(params, x)
    z = jax.block_until_ready(z)
    assert z.shape == (2, 2048), z.shape
    assert bool(jnp.all(jnp.isfinite(z))), "non-finite output"
    print("KERNEL_OK")
</pallas_src>

<mosaic_0001>
module attributes {stable_mosaic.version = 11 : i64} {
  func.func @_conv_bn_stats_kernel(%arg0: i32, %arg1: i32, %arg2: i32, %arg3: memref<2x1x19x3xbf16, #tpu.memory_space<vmem>>, %arg4: memref<49x3x64xbf16, #tpu.memory_space<vmem>>, %arg5: memref<1x1x16x64xbf16, #tpu.memory_space<vmem>>, %arg6: memref<1x1x1x64xf32, #tpu.memory_space<vmem>>, %arg7: memref<1x1x1x64xf32, #tpu.memory_space<vmem>>, %arg8: memref<16x64xf32, #tpu.memory_space<vmem>>) attributes {dimension_semantics = [#tpu.dimension_semantics<parallel>, #tpu.dimension_semantics<parallel>, #tpu.dimension_semantics<arbitrary>], iteration_bounds = array<i64: 2, 16, 7>, scalar_prefetch = 0 : i64, scratch_operands = 1 : i64, tpu.core_type = #tpu.core_type<tc>, window_params = [{transform_indices = @transform_0, window_bounds = array<i64: 2, 1, 19, 3>}, {pipeline_mode = #tpu.pipeline_mode<synchronous>, transform_indices = @transform_1, window_bounds = array<i64: 49, 3, 64>}, {transform_indices = @transform_2, window_bounds = array<i64: 1, 1, 16, 64>}, {transform_indices = @transform_3, window_bounds = array<i64: 1, 1, 1, 64>}, {transform_indices = @transform_4, window_bounds = array<i64: 1, 1, 1, 64>}]} {
    %c0_i32 = arith.constant 0 : i32
    %0 = arith.cmpi eq, %arg2, %c0_i32 : i32
    %1 = arith.extui %0 : i1 to i32
    %c0_i32_0 = arith.constant 0 : i32
    %2 = arith.cmpi ne, %1, %c0_i32_0 : i32
    scf.if %2 {
      %cst_58 = arith.constant 0.000000e+00 : f32
      %71 = vector.broadcast %cst_58 : f32 to vector<16x64xf32>
      %c0_59 = arith.constant 0 : index
      %c0_60 = arith.constant 0 : index
      %72 = vector.load %arg8[%c0_59, %c0_60] : memref<16x64xf32, #tpu.memory_space<vmem>>, vector<16x64xf32>
      tpu.vector_store %arg8[%c0_59, %c0_60], %71 {strides = array<i32>} : memref<16x64xf32, #tpu.memory_space<vmem>>, vector<16x64xf32>,
    } else {
    }
    %c0 = arith.constant 0 : index
    %c0_1 = arith.constant 0 : index
    %3 = vector.load %arg8[%c0, %c0_1] : memref<16x64xf32, #tpu.memory_space<vmem>>, vector<16x64xf32>
    %c0_2 = arith.constant 0 : index
    %c0_3 = arith.constant 0 : index
    %c0_4 = arith.constant 0 : index
    %c0_5 = arith.constant 0 : index
    %4 = vector.load %arg3[%c0_2, %c0_3, %c0_4, %c0_5] : memref<2x1x19x3xbf16, #tpu.memory_space<vmem>>, vector<1x1x16x3xbf16>
    %5 = vector.shape_cast %4 : vector<1x1x16x3xbf16> to vector<16x3xbf16>
    %c7_i32 = arith.constant 7 : i32
    %6 = arith.muli %arg2, %c7_i32 : i32
    %c0_i32_6 = arith.constant 0 : i32
    %7 = arith.addi %6, %c0_i32_6 : i32
    %8 = arith.index_cast %7 : i32 to index
    %c0_7 = arith.constant 0 : index
    %c0_8 = arith.constant 0 : index
    %9 = vector.load %arg4[%8, %c0_7, %c0_8] : memref<49x3x64xbf16, #tpu.memory_space<vmem>>, vector<1x3x64xbf16>
    %10 = vector.shape_cast %9 : vector<1x3x64xbf16> to vector<3x64xbf16>
    %cst = arith.constant dense<0.000000e+00> : vector<16x64xf32>
    %11 = tpu.matmul %5, %10, %cst {dimension_numbers = #tpu.dot_dimension_numbers<[1], [0], [0], [1], [0, 0, 1, 1], [], []>} : vector<16x3xbf16>, vector<3x64xbf16>, vector<16x64xf32> -> vector<16x64xf32>
    %12 = arith.addf %3, %11 : vector<16x64xf32>
    %c1 = arith.constant 1 : index
    %c0_9 = arith.constant 0 : index
    %c0_10 = arith.constant 0 : index
    %c0_11 = arith.constant 0 : index
    %13 = vector.load %arg3[%c1, %c0_9, %c0_10, %c0_11] : memref<2x1x19x3xbf16, #tpu.memory_space<vmem>>, vector<1x1x16x3xbf16>
    %14 = vector.shape_cast %13 : vector<1x1x16x3xbf16> to vector<16x3xbf16>
    %c7_i32_12 = arith.constant 7 : i32
    %15 = arith.muli %arg2, %c7_i32_12 : i32
    %c1_i32 = arith.constant 1 : i32
    %16 = arith.addi %15, %c1_i32 : i32
    %17 = arith.index_cast %16 : i32 to index
    %c0_13 = arith.constant 0 : index
    %c0_14 = arith.constant 0 : index
    %18 = vector.load %arg4[%17, %c0_13, %c0_14] : memref<49x3x64xbf16, #tpu.memory_space<vmem>>, vector<1x3x64xbf16>
    %19 = vector.shape_cast %18 : vector<1x3x64xbf16> to vector<3x64xbf16>
    %cst_15 = arith.constant dense<0.000000e+00> : vector<16x64xf32>
    %20 = tpu.matmul %14, %19, %cst_15 {dimension_numbers = #tpu.dot_dimension_numbers<[1], [0], [0], [1], [0, 0, 1, 1], [], []>} : vector<16x3xbf16>, vector<3x64xbf16>, vector<16x64xf32> -> vector<16x64xf32>
    %21 = arith.addf %12, %20 : vector<16x64xf32>
    %c0_16 = arith.constant 0 : index
    %c0_17 = arith.constant 0 : index
    %c1_18 = arith.constant 1 : index
    %c0_19 = arith.constant 0 : index
    %22 = vector.load %arg3[%c0_16, %c0_17, %c1_18, %c0_19] : memref<2x1x19x3xbf16, #tpu.memory_space<vmem>>, vector<1x1x16x3xbf16>
    %23 = vector.shape_cast %22 : vector<1x1x16x3xbf16> to vector<16x3xbf16>
    %c7_i32_20 = arith.constant 7 : i32
    %24 = arith.muli %arg2, %c7_i32_20 : i32
    %c2_i32 = arith.constant 2 : i32
    %25 = arith.addi %24, %c2_i32 : i32
    %26 = arith.index_cast %25 : i32 to index
    %c0_21 = arith.constant 0 : index
    %c0_22 = arith.constant 0 : index
    %27 = vector.load %arg4[%26, %c0_21, %c0_22] : memref<49x3x64xbf16, #tpu.memory_space<vmem>>, vector<1x3x64xbf16>
    %28 = vector.shape_cast %27 : vector<1x3x64xbf16> to vector<3x64xbf16>
    %cst_23 = arith.constant dense<0.000000e+00> : vector<16x64xf32>
    %29 = tpu.matmul %23, %28, %cst_23 {dimension_numbers = #tpu.dot_dimension_numbers<[1], [0], [0], [1], [0, 0, 1, 1], [], []>} : vector<16x3xbf16>, vector<3x64xbf16>, vector<16x64xf32> -> vector<16x64xf32>
    %30 = arith.addf %21, %29 : vector<16x64xf32>
    %c1_24 = arith.constant 1 : index
    %c0_25 = arith.constant 0 : index
    %c1_26 = arith.constant 1 : index
    %c0_27 = arith.constant 0 : index
    %31 = vector.load %arg3[%c1_24, %c0_25, %c1_26, %c0_27] : memref<2x1x19x3xbf16, #tpu.memory_space<vmem>>, vector<1x1x16x3xbf16>
    %32 = vector.shape_cast %31 : vector<1x1x16x3xbf16> to vector<16x3xbf16>
    %c7_i32_28 = arith.constant 7 : i32
    %33 = arith.muli %arg2, %c7_i32_28 : i32
    %c3_i32 = arith.constant 3 : i32
    %34 = arith.addi %33, %c3_i32 : i32
    %35 = arith.index_cast %34 : i32 to index
    %c0_29 = arith.constant 0 : index
    %c0_30 = arith.constant 0 : index
    %36 = vector.load %arg4[%35, %c0_29, %c0_30] : memref<49x3x64xbf16, #tpu.memory_space<vmem>>, vector<1x3x64xbf16>
    %37 = vector.shape_cast %36 : vector<1x3x64xbf16> to vector<3x64xbf16>
    %cst_31 = arith.constant dense<0.000000e+00> : vector<16x64xf32>
    %38 = tpu.matmul %32, %37, %cst_31 {dimension_numbers = #tpu.dot_dimension_numbers<[1], [0], [0], [1], [0, 0, 1, 1], [], []>} : vector<16x3xbf16>, vector<3x64xbf16>, vector<16x64xf32> -> vector<16x64xf32>
    %39 = arith.addf %30, %38 : vector<16x64xf32>
    %c0_32 = arith.constant 0 : index
    %c0_33 = arith.constant 0 : index
    %c2 = arith.constant 2 : index
    %c0_34 = arith.constant 0 : index
    %40 = vector.load %arg3[%c0_32, %c0_33, %c2, %c0_34] : memref<2x1x19x3xbf16, #tpu.memory_space<vmem>>, vector<1x1x16x3xbf16>
    %41 = vector.shape_cast %40 : vector<1x1x16x3xbf16> to vector<16x3xbf16>
    %c7_i32_35 = arith.constant 7 : i32
    %42 = arith.muli %arg2, %c7_i32_35 : i32
    %c4_i32 = arith.constant 4 : i32
    %43 = arith.addi %42, %c4_i32 : i32
    %44 = arith.index_cast %43 : i32 to index
    %c0_36 = arith.constant 0 : index
    %c0_37 = arith.constant 0 : index
    %45 = vector.load %arg4[%44, %c0_36, %c0_37] : memref<49x3x64xbf16, #tpu.memory_space<vmem>>, vector<1x3x64xbf16>
    %46 = vector.shape_cast %45 : vector<1x3x64xbf16> to vector<3x64xbf16>
    %cst_38 = arith.constant dense<0.000000e+00> : vector<16x64xf32>
    %47 = tpu.matmul %41, %46, %cst_38 {dimension_numbers = #tpu.dot_dimension_numbers<[1], [0], [0], [1], [0, 0, 1, 1], [], []>} : vector<16x3xbf16>, vector<3x64xbf16>, vector<16x64xf32> -> vector<16x64xf32>
    %48 = arith.addf %39, %47 : vector<16x64xf32>
    %c1_39 = arith.constant 1 : index
    %c0_40 = arith.constant 0 : index
    %c2_41 = arith.constant 2 : index
    %c0_42 = arith.constant 0 : index
    %49 = vector.load %arg3[%c1_39, %c0_40, %c2_41, %c0_42] : memref<2x1x19x3xbf16, #tpu.memory_space<vmem>>, vector<1x1x16x3xbf16>
    %50 = vector.shape_cast %49 : vector<1x1x16x3xbf16> to vector<16x3xbf16>
    %c7_i32_43 = arith.constant 7 : i32
    %51 = arith.muli %arg2, %c7_i32_43 : i32
    %c5_i32 = arith.constant 5 : i32
    %52 = arith.addi %51, %c5_i32 : i32
    %53 = arith.index_cast %52 : i32 to index
    %c0_44 = arith.constant 0 : index
    %c0_45 = arith.constant 0 : index
    %54 = vector.load %arg4[%53, %c0_44, %c0_45] : memref<49x3x64xbf16, #tpu.memory_space<vmem>>, vector<1x3x64xbf16>
    %55 = vector.shape_cast %54 : vector<1x3x64xbf16> to vector<3x64xbf16>
    %cst_46 = arith.constant dense<0.000000e+00> : vector<16x64xf32>
    %56 = tpu.matmul %50, %55, %cst_46 {dimension_numbers = #tpu.dot_dimension_numbers<[1], [0], [0], [1], [0, 0, 1, 1], [], []>} : vector<16x3xbf16>, vector<3x64xbf16>, vector<16x64xf32> -> vector<16x64xf32>
    %57 = arith.addf %48, %56 : vector<16x64xf32>
    %c0_47 = arith.constant 0 : index
    %c0_48 = arith.constant 0 : index
    %c3 = arith.constant 3 : index
    %c0_49 = arith.constant 0 : index
    %58 = vector.load %arg3[%c0_47, %c0_48, %c3, %c0_49] : memref<2x1x19x3xbf16, #tpu.memory_space<vmem>>, vector<1x1x16x3xbf16>
    %59 = vector.shape_cast %58 : vector<1x1x16x3xbf16> to vector<16x3xbf16>
    %c7_i32_50 = arith.constant 7 : i32
    %60 = arith.muli %arg2, %c7_i32_50 : i32
    %c6_i32 = arith.constant 6 : i32
    %61 = arith.addi %60, %c6_i32 : i32
    %62 = arith.index_cast %61 : i32 to index
    %c0_51 = arith.constant 0 : index
    %c0_52 = arith.constant 0 : index
    %63 = vector.load %arg4[%62, %c0_51, %c0_52] : memref<49x3x64xbf16, #tpu.memory_space<vmem>>, vector<1x3x64xbf16>
    %64 = vector.shape_cast %63 : vector<1x3x64xbf16> to vector<3x64xbf16>
    %cst_53 = arith.constant dense<0.000000e+00> : vector<16x64xf32>
    %65 = tpu.matmul %59, %64, %cst_53 {dimension_numbers = #tpu.dot_dimension_numbers<[1], [0], [0], [1], [0, 0, 1, 1], [], []>} : vector<16x3xbf16>, vector<3x64xbf16>, vector<16x64xf32> -> vector<16x64xf32>
    %66 = arith.addf %57, %65 : vector<16x64xf32>
    %c0_54 = arith.constant 0 : index
    %c0_55 = arith.constant 0 : index
    %67 = vector.load %arg8[%c0_54, %c0_55] : memref<16x64xf32, #tpu.memory_space<vmem>>, vector<16x64xf32>
    tpu.vector_store %arg8[%c0_54, %c0_55], %66 {strides = array<i32>} : memref<16x64xf32, #tpu.memory_space<vmem>>, vector<16x64xf32>,
    %c6_i32_56 = arith.constant 6 : i32
    %68 = arith.cmpi eq, %arg2, %c6_i32_56 : i32
    %69 = arith.extui %68 : i1 to i32
    %c0_i32_57 = arith.constant 0 : i32
    %70 = arith.cmpi ne, %69, %c0_i32_57 : i32
    scf.if %70 {
      %c0_58 = arith.constant 0 : index
      %c0_59 = arith.constant 0 : index
      %71 = vector.load %arg8[%c0_58, %c0_59] : memref<16x64xf32, #tpu.memory_space<vmem>>, vector<16x64xf32>
      %72 = arith.truncf %71 : vector<16x64xf32> to vector<16x64xbf16>
      %c0_60 = arith.constant 0 : index
      %c0_61 = arith.constant 0 : index
      %c0_62 = arith.constant 0 : index
      %c0_63 = arith.constant 0 : index
      %73 = vector.load %arg5[%c0_60, %c0_61, %c0_62, %c0_63] : memref<1x1x16x64xbf16, #tpu.memory_space<vmem>>, vector<1x1x16x64xbf16>
      %74 = vector.shape_cast %73 : vector<1x1x16x64xbf16> to vector<16x64xbf16>
      %75 = vector.shape_cast %72 : vector<16x64xbf16> to vector<1x1x16x64xbf16>
      tpu.vector_store %arg5[%c0_60, %c0_61, %c0_62, %c0_63], %75 {strides = array<i32>} : memref<1x1x16x64xbf16, #tpu.memory_space<vmem>>, vector<1x1x16x64xbf16>,
      %cst_64 = arith.constant dense<0.000000e+00> : vector<64xf32>
      %76 = vector.multi_reduction <add>, %71, %cst_64 [0] : vector<16x64xf32> to vector<64xf32>
      %77 = vector.shape_cast %76 : vector<64xf32> to vector<1x64xf32>
      %c0_65 = arith.constant 0 : index
      %c0_66 = arith.constant 0 : index
      %c0_67 = arith.constant 0 : index
      %c0_68 = arith.constant 0 : index
      %78 = vector.load %arg6[%c0_65, %c0_66, %c0_67, %c0_68] : memref<1x1x1x64xf32, #tpu.memory_space<vmem>>, vector<1x1x1x64xf32>
      %79 = vector.shape_cast %78 : vector<1x1x1x64xf32> to vector<1x64xf32>
      %80 = vector.shape_cast %77 : vector<1x64xf32> to vector<1x1x1x64xf32>
      tpu.vector_store %arg6[%c0_65, %c0_66, %c0_67, %c0_68], %80 {strides = array<i32>} : memref<1x1x1x64xf32, #tpu.memory_space<vmem>>, vector<1x1x1x64xf32>,
      %81 = arith.mulf %71, %71 : vector<16x64xf32>
      %cst_69 = arith.constant dense<0.000000e+00> : vector<64xf32>
      %82 = vector.multi_reduction <add>, %81, %cst_69 [0] : vector<16x64xf32> to vector<64xf32>
      %83 = vector.shape_cast %82 : vector<64xf32> to vector<1x64xf32>
      %c0_70 = arith.constant 0 : index
      %c0_71 = arith.constant 0 : index
      %c0_72 = arith.constant 0 : index
      %c0_73 = arith.constant 0 : index
      %84 = vector.load %arg7[%c0_70, %c0_71, %c0_72, %c0_73] : memref<1x1x1x64xf32, #tpu.memory_space<vmem>>, vector<1x1x1x64xf32>
      %85 = vector.shape_cast %84 : vector<1x1x1x64xf32> to vector<1x64xf32>
      %86 = vector.shape_cast %83 : vector<1x64xf32> to vector<1x1x1x64xf32>
      tpu.vector_store %arg7[%c0_70, %c0_71, %c0_72, %c0_73], %86 {strides = array<i32>} : memref<1x1x1x64xf32, #tpu.memory_space<vmem>>, vector<1x1x1x64xf32>,
    } else {
    }
    return
  }
  func.func @transform_0(%arg0: i32, %arg1: i32, %arg2: i32) -> (i32, i32, i32, i32) {
    %c2_i32 = arith.constant 2 : i32
    %0 = arith.muli %arg1, %c2_i32 : i32
    %1 = arith.addi %0, %arg2 : i32
    %c0_i32 = arith.constant 0 : i32
    %c0_i32_0 = arith.constant 0 : i32
    %c0_i32_1 = arith.constant 0 : i32
    return %arg0, %1, %c0_i32, %c0_i32_0 : i32, i32, i32, i32
  }
  func.func @transform_1(%arg0: i32, %arg1: i32, %arg2: i32) -> (i32, i32, i32) {
    %c0_i32 = arith.constant 0 : i32
    %c0_i32_0 = arith.constant 0 : i32
    %c0_i32_1 = arith.constant 0 : i32
    %c0_i32_2 = arith.constant 0 : i32
    return %c0_i32, %c0_i32_0, %c0_i32_1 : i32, i32, i32
  }
  func.func @transform_2(%arg0: i32, %arg1: i32, %arg2: i32) -> (i32, i32, i32, i32) {
    %c0_i32 = arith.constant 0 : i32
    %c0_i32_0 = arith.constant 0 : i32
    %c0_i32_1 = arith.constant 0 : i32
    return %arg0, %arg1, %c0_i32, %c0_i32_0 : i32, i32, i32, i32
  }
  func.func @transform_3(%arg0: i32, %arg1: i32, %arg2: i32) -> (i32, i32, i32, i32) {
    %c0_i32 = arith.constant 0 : i32
    %c0_i32_0 = arith.constant 0 : i32
    %c0_i32_1 = arith.constant 0 : i32
    return %arg0, %arg1, %c0_i32, %c0_i32_0 : i32, i32, i32, i32
  }
  func.func @transform_4(%arg0: i32, %arg1: i32, %arg2: i32) -> (i32, i32, i32, i32) {
    %c0_i32 = arith.constant 0 : i32
    %c0_i32_0 = arith.constant 0 : i32
    %c0_i32_1 = arith.constant 0 : i32
    return %arg0, %arg1, %c0_i32, %c0_i32_0 : i32, i32, i32, i32
  }
}

</mosaic_0001>

<llo_original>
// kernel: tpu_custom_call.1
$region0: #{tpu_custom_call.1}
  #allocation0 [shape = 'u32[]', space=smem, size = 0x4, offset = 0x4, fixed_abs, tag = 'smem constant byte address 0x4 - core index']
  #allocation1 [shape = 'u32[144,128]{1,0:T(1,128)}', space=vmem, size = 0x12000, scoped, tag = 'internal scratch']
  #allocation2 [shape = 'f32[16,64]{1,0:T(8,128)}', space=vmem, size = 0x2000, scoped, tag = 'scratch operand']
  %s0 = inlined_call_operand.vmem [shape: bf16[4,38,19,3], index: 0, kind: input, shape index: {}]
  %s1 = inlined_call_operand.vmem [shape: bf16[49,3,64], index: 1, kind: input, shape index: {}]
  %s2 = inlined_call_operand.hbm [shape: bf16[2,16,16,64], index: 2, kind: output, shape index: {0}]
  %s3 = inlined_call_operand.hbm [shape: f32[2,16,1,64], index: 3, kind: output, shape index: {1}]
  %s4 = inlined_call_operand.hbm [shape: f32[2,16,1,64], index: 4, kind: output, shape index: {2}]
  %5 = xla_tuple %s2, %s3, %s4
  %s6 = sld [smem:[#allocation0]]
  $region106: #{tpu_custom_call.1} parent=0
    _
  %s8 = ssub.s32 1, %s6
  %s9 = scalar_select 0, %s8, %s6
  $region1: #{tpu_custom_call.1} parent=0
    #allocation3 [shape = 'u8[24576]{0}', space=vmem, size = 0x6000, scoped, tag = 'input window, operand 0']
    #allocation4 [shape = 'u8[8192]{0}', space=vmem, size = 0x2000, scoped, tag = 'output window, operand 0']
    #allocation5 [shape = 's32[2]{0}', space=sflag, size = 0x8, scoped, tag = 'scoped memory for tpu_custom_call.1']
    #allocation6 [shape = 'u8[1024]{0}', space=vmem, size = 0x400, scoped, tag = 'output window, operand 1']
    #allocation7 [shape = 's32[2]{0}', space=sflag, size = 0x8, scoped, tag = 'scoped memory for tpu_custom_call.1']
    #allocation8 [shape = 'u8[1024]{0}', space=vmem, size = 0x400, scoped, tag = 'output window, operand 2']
    %10 = vsyncpa [#allocation5], 0
    %s11 = scalar_lea.sflag [#allocation5], 1
    %12 = vsyncpa %s11, 0
    %13 = vsyncpa [#allocation7], 0
    %s14 = scalar_lea.sflag [#allocation7], 1
    %15 = vsyncpa %s14, 0
    loop: start=0, step=1, limit=226
    $region2: #{tpu_custom_call.1} parent=1 // loop_pre_header
      _
    $region3: #{tpu_custom_call.1} parent=1 // loop_header
      %s17 = sphi 0, %s21
      %p18 = scmp.ge.s32.totalorder %s17, 226
      %s24 = sphi 0, %s43
      %s25 = sphi 0, %s39
      %s26 = sphi 0, %s35
      %s27 = sphi 0, %s24
      %s28 = sphi 0, %s25
      %s29 = sphi 0, %s26
      %s30 = sphi 0, %s27
      %s31 = sphi 0, %s28
      %s32 = sphi 0, %s29
      %s52 = sphi 0, %s54
      %s55 = sphi 0, %s52
      %s56 = sphi 0, %s55
      %s72 = sphi 0, %s56
      %s76 = sphi 0, %s76
      %s78 = sphi 0, %s76
      %s79 = sphi 0, %s78
      %s93 = sphi 0, %s79
      %s101 = sphi 0, %s103
      %s104 = sphi 0, %s101
      %s105 = sphi 0, %s104
      %s121 = sphi 0, %s105
      %s129 = sphi 0, %s131
      %s132 = sphi 0, %s129
      %s133 = sphi 0, %s132
      %s149 = sphi 0, %s133
      %s157 = sphi 0, %s159
      %s160 = sphi 0, %s157
      %s161 = sphi 0, %s160
      %s177 = sphi 0, %s161
    $region4: #{tpu_custom_call.1} parent=1 // loop_header_branch
      %20 = sbr.rel (%p18) target = $region8
    $region5: #{tpu_custom_call.1} parent=1 // loop_body
      %s22 = ssub.s32 %s17, 1
      %s23 = ssub.s32 %s17, 2
      %s33 = sadd.s32 1, %s26
      %p34 = scmp.ge.s32.totalorder %s33, 7
      %s35 = scalar_select %p34, 0, %s33
      %s36 = sadd.s32 1, %s25
      %s37 = scalar_select %p34, %s36, %s25
      %p38 = scmp.ge.s32.totalorder %s37, 16
      %s39 = scalar_select %p38, 0, %s37
      %s40 = sadd.s32 1, %s24
      %s41 = scalar_select %p38, %s40, %s24
      %p42 = scmp.ge.s32.totalorder %s41, 2
      %s43 = scalar_select %p42, 0, %s41
      %s44 = smul.u32 %s25, 2
      %s45 = sadd.s32 %s44, %s26
      %s46 = smul.u32 %s39, 2
      %s47 = sadd.s32 %s46, %s35
      %s48 = ssub.s32 %s24, %s43
      %s49 = ssub.s32 %s45, %s47
      %s50 = sor.u32 %s48, %s49
      %p51 = scmp.eq.s32.totalorder %s50, 0
      %s53 = sadd.s32 %s52, 1
      %s54 = scalar_select %p51, %s52, %s53
      %p57 = pneg %p51
      %p58 = scmp.eq.s32.totalorder %s17, 223
      %p59 = por %p57, %p58
      %p60 = scmp.ne.s32.totalorder %s52, %s55
      %p61 = scmp.eq.s32.totalorder %s17, 0
      %p62 = por %p60, %p61
      %p63 = scmp.ne.s32.totalorder %s52, %s55
      %p64 = scmp.eq.s32.totalorder %s22, 223
      %p65 = por %p63, %p64
      %p66 = scmp.ne.s32.totalorder %s55, %s56
      %p67 = scmp.eq.s32.totalorder %s22, 0
      %p68 = por %p66, %p67
      %p69 = scmp.ne.s32.totalorder %s55, %s56
      %p70 = scmp.eq.s32.totalorder %s23, 223
      %p71 = por %p69, %p70
      %p73 = scmp.ne.s32.totalorder %s56, %s72
      %p74 = scmp.eq.s32.totalorder %s23, 0
      %p75 = por %p73, %p74
      %s77 = sadd.s32 %s76, 1
      %p80 = scmp.eq.s32.totalorder %s17, 223
      %p81 = scmp.ne.s32.totalorder %s76, %s78
      %p82 = scmp.eq.s32.totalorder %s17, 0
      %p83 = por %p81, %p82
      %p84 = scmp.ne.s32.totalorder %s76, %s78
      %p85 = scmp.eq.s32.totalorder %s22, 223
      %p86 = por %p84, %p85
      %p87 = scmp.ne.s32.totalorder %s78, %s79
      %p88 = scmp.eq.s32.totalorder %s22, 0
      %p89 = por %p87, %p88
      %p90 = scmp.ne.s32.totalorder %s78, %s79
      %p91 = scmp.eq.s32.totalorder %s23, 223
      %p92 = por %p90, %p91
      %p94 = scmp.ne.s32.totalorder %s79, %s93
      %p95 = scmp.eq.s32.totalorder %s23, 0
      %p96 = por %p94, %p95
      %s97 = ssub.s32 %s24, %s43
      %s98 = ssub.s32 %s25, %s39
      %s99 = sor.u32 %s97, %s98
      %p100 = scmp.eq.s32.totalorder %s99, 0
      %s102 = sadd.s32 %s101, 1
      %s103 = scalar_select %p100, %s101, %s102
      %p106 = pneg %p100
      %p107 = scmp.eq.s32.totalorder %s17, 223
      %p108 = por %p106, %p107
      %p109 = scmp.ne.s32.totalorder %s101, %s104
      %p110 = scmp.eq.s32.totalorder %s17, 0
      %p111 = por %p109, %p110
      %p112 = scmp.ne.s32.totalorder %s101, %s104
      %p113 = scmp.eq.s32.totalorder %s22, 223
      %p114 = por %p112, %p113
      %p115 = scmp.ne.s32.totalorder %s104, %s105
      %p116 = scmp.eq.s32.totalorder %s22, 0
      %p117 = por %p115, %p116
      %p118 = scmp.ne.s32.totalorder %s104, %s105
      %p119 = scmp.eq.s32.totalorder %s23, 223
      %p120 = por %p118, %p119
      %p122 = scmp.ne.s32.totalorder %s105, %s121
      %p123 = scmp.eq.s32.totalorder %s23, 0
      %p124 = por %p122, %p123
      %s125 = ssub.s32 %s24, %s43
      %s126 = ssub.s32 %s25, %s39
      %s127 = sor.u32 %s125, %s126
      %p128 = scmp.eq.s32.totalorder %s127, 0
      %s130 = sadd.s32 %s129, 1
      %s131 = scalar_select %p128, %s129, %s130
      %p134 = pneg %p128
      %p135 = scmp.eq.s32.totalorder %s17, 223
      %p136 = por %p134, %p135
      %p137 = scmp.ne.s32.totalorder %s129, %s132
      %p138 = scmp.eq.s32.totalorder %s17, 0
      %p139 = por %p137, %p138
      %p140 = scmp.ne.s32.totalorder %s129, %s132
      %p141 = scmp.eq.s32.totalorder %s22, 223
      %p142 = por %p140, %p141
      %p143 = scmp.ne.s32.totalorder %s132, %s133
      %p144 = scmp.eq.s32.totalorder %s22, 0
      %p145 = por %p143, %p144
      %p146 = scmp.ne.s32.totalorder %s132, %s133
      %p147 = scmp.eq.s32.totalorder %s23, 223
      %p148 = por %p146, %p147
      %p150 = scmp.ne.s32.totalorder %s133, %s149
      %p151 = scmp.eq.s32.totalorder %s23, 0
      %p152 = por %p150, %p151
      %s153 = ssub.s32 %s24, %s43
      %s154 = ssub.s32 %s25, %s39
      %s155 = sor.u32 %s153, %s154
      %p156 = scmp.eq.s32.totalorder %s155, 0
      %s158 = sadd.s32 %s157, 1
      %s159 = scalar_select %p156, %s157, %s158
      %p162 = pneg %p156
      %p163 = scmp.eq.s32.totalorder %s17, 223
      %p164 = por %p162, %p163
      %p165 = scmp.ne.s32.totalorder %s157, %s160
      %p166 = scmp.eq.s32.totalorder %s17, 0
      %p167 = por %p165, %p166
      %p168 = scmp.ne.s32.totalorder %s157, %s160
      %p169 = scmp.eq.s32.totalorder %s22, 223
      %p170 = por %p168, %p169
      %p171 = scmp.ne.s32.totalorder %s160, %s161
      %p172 = scmp.eq.s32.totalorder %s22, 0
      %p173 = por %p171, %p172
      %p174 = scmp.ne.s32.totalorder %s160, %s161
      %p175 = scmp.eq.s32.totalorder %s23, 223
      %p176 = por %p174, %p175
      %p178 = scmp.ne.s32.totalorder %s161, %s177
      %p179 = scmp.eq.s32.totalorder %s23, 0
      %p180 = por %p178, %p179
      %p181 = scmp.le.s32.totalorder 1, %s17
      %p182 = scmp.lt.s32.totalorder %s17, 225
      %p183 = pnand %p181, %p182
      %p184 = pneg %p183
      // Predicated region
      $region9: #{tpu_custom_call.1} parent=5 // pred_check
        _
      $region10: #{tpu_custom_call.1} parent=5 // pred_check_branch
        %186 = sbr.rel (%p183) target = $region12
      $region11: #{tpu_custom_call.1} parent=5 // pred_region
        %s187 = ssub.s32 %s17, 1
        // Predicated region
        $region13: #{tpu_custom_call.1} parent=11 // pred_check
          %p188 = pneg %p89
        $region14: #{tpu_custom_call.1} parent=11 // pred_check_branch
          %190 = sbr.rel (%p188) target = $region16
        $region15: #{tpu_custom_call.1} parent=11 // pred_region
          _
        $region16: #{tpu_custom_call.1} parent=11 // pred_fallthru
          _
      $region12: #{tpu_custom_call.1} parent=5 // pred_fallthru
        _
      %p191 = scmp.lt.s32.totalorder %s17, 224
      // Predicated region
      $region17: #{tpu_custom_call.1} parent=5 // pred_check
        %p192 = pneg %p191
      $region18: #{tpu_custom_call.1} parent=5 // pred_check_branch
        %194 = sbr.rel (%p192) target = $region20
      $region19: #{tpu_custom_call.1} parent=5 // pred_region
        // Predicated region
        $region21: #{tpu_custom_call.1} parent=19 // pred_check
          %p195 = pneg %p62
        $region22: #{tpu_custom_call.1} parent=19 // pred_check_branch
          %197 = sbr.rel (%p195) target = $region24
        $region23: #{tpu_custom_call.1} parent=19 // pred_region
          %s198 = sand.u32 %s52, 1
          %s199 = sand.u32 %s52, 1
          %s200 = smul.addr %s199, 24
          %s201 = scalar_lea.vmem [#allocation3], %s200
          %s202 = smul.u32 %s25, 2
          %s203 = sadd.s32 %s202, %s26
          %s204 = smul.u32 2, %s24
          %s205 = smul.addr %s203, 3
          %s206 = smul.addr %s204, 114
          %s207 = sadd.s32 %s205, %s206
          %s208 = smul.addr %s207, 4
          %s209 = scalar_lea.vmem %s0, %s208
          // Predicated region
          $region25: #{tpu_custom_call.1} parent=23 // pred_check
            _
          $region26: #{tpu_custom_call.1} parent=23 // pred_check_branch
            %211 = sbr.rel (0) target = $region28
          $region27: #{tpu_custom_call.1} parent=23 // pred_region
            // Predicated region
            $region29: #{tpu_custom_call.1} parent=27 // pred_check
              _
            $region30: #{tpu_custom_call.1} parent=27 // pred_check_branch
              %213 = sbr.rel target = $region32
            $region31: #{tpu_custom_call.1} parent=27 // pred_region
              // Predicated region
              $region44: #{tpu_custom_call.1} parent=31 // pred_check
                _
              $region45: #{tpu_custom_call.1} parent=31 // pred_check_branch
                %239 = sbr.rel (0) target = $region47
              $region46: #{tpu_custom_call.1} parent=31 // pred_region
                loop: start=0, step=1, limit=1
                $region48: #{tpu_custom_call.1} parent=46 // loop_pre_header
                  _
                $region49: #{tpu_custom_call.1} parent=46 // loop_header
                  %s241 = sphi 0, %s245
                  %p242 = scmp.ge.s32.totalorder %s241, 1
                  %s246 = sphi %s209, %s209
                  %s247 = sphi %s201, %s201
                $region50: #{tpu_custom_call.1} parent=46 // loop_header_branch
                  %244 = sbr.rel (%p242) target = $region54
                $region51: #{tpu_custom_call.1} parent=46 // loop_body
                  _
                $region52: #{tpu_custom_call.1} parent=46 // loop_footer
                  %s245 = sadd.s32 1, %s241
                $region53: #{tpu_custom_call.1} parent=46 // loop_footer_branch
                  %240 = sbr.rel target = $region49
                $region54: #{tpu_custom_call.1} parent=46 // loop_exit
                  _
                %s249 = ssub.s32 16, 1
                loop: start=0, step=1, limit=1
                $region55: #{tpu_custom_call.1} parent=46 // loop_pre_header
                  _
                $region56: #{tpu_custom_call.1} parent=46 // loop_header
                  %s251 = sphi 0, %s255
                  %p252 = scmp.ge.s32.totalorder %s251, 1
                  %s256 = sphi %s209, %s209
                  %s257 = sphi %s201, %s201
                $region57: #{tpu_custom_call.1} parent=46 // loop_header_branch
                  %254 = sbr.rel (%p252) target = $region61
                $region58: #{tpu_custom_call.1} parent=46 // loop_body
                  %v258 = vld [vmem:[%s256] sm:%s249]
                  %259 = vst [vmem:[%s257] sm:%s249] %v258
                  %v260 = vld [vmem:[%s256 + $0x4] sm:%s249]
                  %261 = vst [vmem:[%s257 + $0x4] sm:%s249] %v260
                  %v262 = vld [vmem:[%s256 + $0x8] sm:%s249]
                  %263 = vst [vmem:[%s257 + $0x8] sm:%s249] %v262
                  %v264 = vld [vmem:[%s256 + $0x1c8] sm:%s249]
                  %265 = vst [vmem:[%s257 + $0xc] sm:%s249] %v264
                  %v266 = vld [vmem:[%s256 + $0x1cc] sm:%s249]
                  %267 = vst [vmem:[%s257 + $0x10] sm:%s249] %v266
                  %v268 = vld [vmem:[%s256 + $0x1d0] sm:%s249]
                  %269 = vst [vmem:[%s257 + $0x14] sm:%s249] %v268
                $region59: #{tpu_custom_call.1} parent=46 // loop_footer
                  %s255 = sadd.s32 1, %s251
                $region60: #{tpu_custom_call.1} parent=46 // loop_footer_branch
                  %250 = sbr.rel target = $region56
                $region61: #{tpu_custom_call.1} parent=46 // loop_exit
                  _
              $region47: #{tpu_custom_call.1} parent=31 // pred_fallthru
                _
            $region32: #{tpu_custom_call.1} parent=27 // pred_fallthru
              _
            // Predicated region
            $region33: #{tpu_custom_call.1} parent=27 // pred_check
              _
            $region34: #{tpu_custom_call.1} parent=27 // pred_check_branch
              %215 = sbr.rel (0) target = $region36
            $region35: #{tpu_custom_call.1} parent=27 // pred_region
              %s217 = ssub.s32 16, 1
              loop: start=0, step=1, limit=1
              $region37: #{tpu_custom_call.1} parent=35 // loop_pre_header
                _
              $region38: #{tpu_custom_call.1} parent=35 // loop_header
                %s219 = sphi 0, %s223
                %p220 = scmp.ge.s32.totalorder %s219, 1
                %s224 = sphi %s209, %s209
                %s225 = sphi %s201, %s201
              $region39: #{tpu_custom_call.1} parent=35 // loop_header_branch
                %222 = sbr.rel (%p220) target = $region43
              $region40: #{tpu_custom_call.1} parent=35 // loop_body
                %v226 = vld [vmem:[%s224] sm:%s217]
                %227 = vst [vmem:[%s225] sm:%s217] %v226
                %v228 = vld [vmem:[%s224 + $0x4] sm:%s217]
                %229 = vst [vmem:[%s225 + $0x4] sm:%s217] %v228
                %v230 = vld [vmem:[%s224 + $0x8] sm:%s217]
                %231 = vst [vmem:[%s225 + $0x8] sm:%s217] %v230
                %v232 = vld [vmem:[%s224 + $0x1c8] sm:%s217]
                %233 = vst [vmem:[%s225 + $0xc] sm:%s217] %v232
                %v234 = vld [vmem:[%s224 + $0x1cc] sm:%s217]
                %235 = vst [vmem:[%s225 + $0x10] sm:%s217] %v234
                %v236 = vld [vmem:[%s224 + $0x1d0] sm:%s217]
                %237 = vst [vmem:[%s225 + $0x14] sm:%s217] %v236
              $region41: #{tpu_custom_call.1} parent=35 // loop_footer
                %s223 = sadd.s32 1, %s219
              $region42: #{tpu_custom_call.1} parent=35 // loop_footer_branch
                %218 = sbr.rel target = $region38
              $region43: #{tpu_custom_call.1} parent=35 // loop_exit
                _
            $region36: #{tpu_custom_call.1} parent=27 // pred_fallthru
              _
          $region28: #{tpu_custom_call.1} parent=23 // pred_fallthru
            _
          %270 = vnop
        $region24: #{tpu_custom_call.1} parent=19 // pred_fallthru
          _
      $region20: #{tpu_custom_call.1} parent=5 // pred_fallthru
        _
      %p271 = scmp.le.s32.totalorder 1, %s17
      %p272 = scmp.lt.s32.totalorder %s17, 225
      %p273 = pnand %p271, %p272
      %p274 = pneg %p273
      // Predicated region
      $region62: #{tpu_custom_call.1} parent=5 // pred_check
        _
      $region63: #{tpu_custom_call.1} parent=5 // pred_check_branch
        %276 = sbr.rel (%p273) target = $region65
      $region64: #{tpu_custom_call.1} parent=5 // pred_region
        %s277 = ssub.s32 %s17, 1
        %s278 = sand.u32 %s55, 1
        %s279 = sand.u32 %s55, 1
        %s280 = smul.addr %s279, 24
        %s281 = scalar_lea.vmem [#allocation3], %s280
        // Predicated region
        $region66: #{tpu_custom_call.1} parent=64 // pred_check
          %p282 = pneg %p68
        $region67: #{tpu_custom_call.1} parent=64 // pred_check_branch
          %284 = sbr.rel (%p282) target = $region69
        $region68: #{tpu_custom_call.1} parent=64 // pred_region
          _
        $region69: #{tpu_custom_call.1} parent=64 // pred_fallthru
          _
        %s285 = sand.u32 %s55, 1
        %s286 = sand.u32 %s55, 1
        %s287 = smul.addr %s286, 24
        %s288 = scalar_lea.vmem [#allocation3], %s287
        %p289 = pneg %p68
        %p290 = pneg %p65
        %p291 = pneg %p89
        %p292 = pneg %p86
        %p293 = pneg %p117
        %p294 = pneg %p114
        %s295 = sand.u32 %s104, 1
        %s296 = scalar_lea.sflag [#allocation5], %s295
        %s297 = sand.u32 %s104, 1
        %s298 = smul.addr %s297, 8
        %s299 = scalar_lea.vmem [#allocation4], %s298
        %p300 = pneg %p145
        %p301 = pneg %p142
        %s302 = sand.u32 %s22, 1
        %s303 = scalar_lea.sflag [#allocation7], %s302
        %s304 = sand.u32 %s132, 1
        %s305 = scalar_lea.vmem [#allocation6], %s304
        %p306 = pneg %p173
        %p307 = pneg %p170
        %s308 = sand.u32 %s22, 1
        %s309 = scalar_lea.sflag [#allocation7], %s308
        %s310 = sand.u32 %s160, 1
        %s311 = scalar_lea.vmem [#allocation8], %s310
        %s312 = smul.u32 %s28, 2
        %s313 = sadd.s32 %s312, %s29
        %s314 = smul.u32 2, %s27
        %p316 = scmp.eq.s32.totalorder %s29, 0
        // Predicated region
        $region70: #{tpu_custom_call.1} parent=64 // pred_check
          %p317 = pneg %p316
        $region71: #{tpu_custom_call.1} parent=64 // pred_check_branch
          %319 = sbr.rel (%p317) target = $region73
        $region72: #{tpu_custom_call.1} parent=64 // pred_region
          %vm320 = vcmask 523264
          %321 = vst.msk [vmem:[#allocation2] sm:$0xff] %vm320, 0.0
          %322 = vst.msk [vmem:[#allocation2 + $0x8] sm:$0xff] %vm320, 0.0
        $region73: #{tpu_custom_call.1} parent=64 // pred_fallthru
          _
        %v323 = vld [vmem:[#allocation2] sm:$0xff]
        %v324 = vld [vmem:[#allocation2 + $0x8] sm:$0xff]
        %v325 = vld [vmem:[%s281] sm:$0xf]
        %v326 = vld [vmem:[%s281 + $0x4] sm:$0xf]
        %s327 = smul.u32 %s29, 7
        %s328 = smul.addr %s327, 2
        %s329 = scalar_lea.vmem %s1, %s328
        %v330 = vld [vmem:[%s329] sm:$0x3]
        %v333 = vunpack.c.l.b16 %v325
        %v334 = vunpack.c.l.b16 %v326
        %v335 = vpack.c.b16 %v334, %v333
        %vm336 = vcmask 23552
        %v338 = vsel %vm336, %v335, 0
        %vm340 = vcmask 1040384
        %vm341 = vcmask 1041408
        %v342 = vsel %vm340, 4294967295, 65535
        %v343 = vsel %vm341, %v342, 0
        %v345 = vand.u32 %v330, %v343
        %347 = vmatprep.subr.bf16.mxu0 0
        %348 = vmatpush1.bf16.msra.mxu0 0
        %349 = vmatprep.subr.bf16.mxu0 0
        %350 = vmatpush1.bf16.msra.mxu0 0
        %351 = vmatprep.subr.bf16.mxu0 0
        %352 = vmatpush1.bf16.msra.mxu0 0
        %353 = vmatprep.subr.bf16.mxu0 0
        %354 = vmatpush1.bf16.msra.mxu0 0
        %355 = vmatprep.subr.bf16.mxu0 0
        %356 = vmatpush1.bf16.msra.mxu0 0
        %357 = vmatprep.subr.bf16.mxu0 0
        %358 = vmatpush1.bf16.msra.mxu0 0
        %359 = vmatprep.subr.bf16.mxu0 0
        %360 = vmatpush1.bf16.msra.mxu0 0
        %361 = vmatprep.subr.bf16.mxu0 0
        %362 = vmatpush1.bf16.msra.mxu0 %v345
        %363 = vmatprep.subr.bf16.mxu0 0
        %364 = vmatpush2.bf16.msra.mxu0 0
        %365 = vmatprep.subr.bf16.mxu0 0
        %366 = vmatpush2.bf16.msra.mxu0 0
        %367 = vmatprep.subr.bf16.mxu0 0
        %368 = vmatpush2.bf16.msra.mxu0 0
        %369 = vmatprep.subr.bf16.mxu0 0
        %370 = vmatpush2.bf16.msra.mxu0 0
        %371 = vmatprep.subr.bf16.mxu0 0
        %372 = vmatpush2.bf16.msra.mxu0 0
        %373 = vmatprep.subr.bf16.mxu0 0
        %374 = vmatpush2.bf16.msra.mxu0 0
        %375 = vmatprep.subr.bf16.mxu0 0
        %376 = vmatpush2.bf16.msra.mxu0 0
        %377 = vmatprep.subr.bf16.mxu0 0
        %378 = vmatpush2.bf16.msra.mxu0 0
        %379 = vmatprep.mubr.bf16.mxu0 0
        %380 = vmatmul.mubr.bf16.gmra.mxu0 %v338
        %v381 = vpop.f32.mrf.mxu0
        %v382 = vadd.f32 0.0, %v381
        %v383 = vpop.f32.mrf.mxu0
        %v384 = vpop.f32.mrf.mxu0
        %v385 = vadd.f32 0.0, %v384
        %v386 = vpop.f32.mrf.mxu0
        %387 = vdwg.mxu0
        %v388 = vadd.f32 %v323, %v382
        %v389 = vadd.f32 %v324, %v385
        %s390 = scalar_lea.vmem %s281, 12 [#allocation3]
        %v391 = vld [vmem:[%s390] sm:$0xf]
        %v392 = vld [vmem:[%s390 + $0x4] sm:$0xf]
        %s393 = sadd.s32 %s327, 1
        %s394 = smul.addr %s393, 2
        %s395 = scalar_lea.vmem %s1, %s394
        %v396 = vld [vmem:[%s395] sm:$0x3]
        %v399 = vunpack.c.l.b16 %v391
        %v400 = vunpack.c.l.b16 %v392
        %v401 = vpack.c.b16 %v400, %v399
        %v403 = vsel %vm336, %v401, 0
        %v406 = vand.u32 %v396, %v343
        %408 = vmatprep.subr.bf16.mxu0 0
        %409 = vmatpush1.bf16.msra.mxu0 0
        %410 = vmatprep.subr.bf16.mxu0 0
        %411 = vmatpush1.bf16.msra.mxu0 0
        %412 = vmatprep.subr.bf16.mxu0 0
        %413 = vmatpush1.bf16.msra.mxu0 0
        %414 = vmatprep.subr.bf16.mxu0 0
        %415 = vmatpush1.bf16.msra.mxu0 0
        %416 = vmatprep.subr.bf16.mxu0 0
        %417 = vmatpush1.bf16.msra.mxu0 0
        %418 = vmatprep.subr.bf16.mxu0 0
        %419 = vmatpush1.bf16.msra.mxu0 0
        %420 = vmatprep.subr.bf16.mxu0 0
        %421 = vmatpush1.bf16.msra.mxu0 0
        %422 = vmatprep.subr.bf16.mxu0 0
        %423 = vmatpush1.bf16.msra.mxu0 %v406
        %424 = vmatprep.subr.bf16.mxu0 0
        %425 = vmatpush2.bf16.msra.mxu0 0
        %426 = vmatprep.subr.bf16.mxu0 0
        %427 = vmatpush2.bf16.msra.mxu0 0
        %428 = vmatprep.subr.bf16.mxu0 0
        %429 = vmatpush2.bf16.msra.mxu0 0
        %430 = vmatprep.subr.bf16.mxu0 0
        %431 = vmatpush2.bf16.msra.mxu0 0
        %432 = vmatprep.subr.bf16.mxu0 0
        %433 = vmatpush2.bf16.msra.mxu0 0
        %434 = vmatprep.subr.bf16.mxu0 0
        %435 = vmatpush2.bf16.msra.mxu0 0
        %436 = vmatprep.subr.bf16.mxu0 0
        %437 = vmatpush2.bf16.msra.mxu0 0
        %438 = vmatprep.subr.bf16.mxu0 0
        %439 = vmatpush2.bf16.msra.mxu0 0
        %440 = vmatprep.mubr.bf16.mxu0 0
        %441 = vmatmul.mubr.bf16.gmra.mxu0 %v403
        %v442 = vpop.f32.mrf.mxu0
        %v443 = vadd.f32 0.0, %v442
        %v444 = vpop.f32.mrf.mxu0
        %v445 = vpop.f32.mrf.mxu0
        %v446 = vadd.f32 0.0, %v445
        %v447 = vpop.f32.mrf.mxu0
        %448 = vdwg.mxu0
        %v449 = vadd.f32 %v388, %v443
        %v450 = vadd.f32 %v389, %v446
        %v451 = vld [vmem:[%s281] sm:$0xf]
        %v452 = vld [vmem:[%s281 + $0x4] sm:$0xf]
        %v453 = vld [vmem:[%s281 + $0x8] sm:$0x1]
        %s454 = sadd.s32 %s327, 2
        %s455 = smul.addr %s454, 2
        %s456 = scalar_lea.vmem %s1, %s455
        %v457 = vld [vmem:[%s456] sm:$0x3]
        %v461 = vunpack.c.l.b16 %v451
        %v462 = vunpack.c.l.b16 %v452
        %v463 = vunpack.c.l.b16 %v453
        %v464 = vpack.c.b16 %v462, %v461
        %v465 = vpack.c.b16 %v463, %v463
        %vm466 = vsmask.f32 7424
        %v468 = vshrl.u32 %v464, 16
        %v470 = vshll.u32 %v464, 16
        %v472 = vrot.slane %v470, 1
        %v473 = vor.u32 %v468, %v472
        %v475 = vshll.u32 %v465, 16
        %v477 = vrot.slane %v475, 1
        %v478 = vsel %vm466, %v473, %v477
        %v480 = vsel %vm336, %v478, 0
        %v483 = vand.u32 %v457, %v343
        %485 = vmatprep.subr.bf16.mxu0 0
        %486 = vmatpush1.bf16.msra.mxu0 0
        %487 = vmatprep.subr.bf16.mxu0 0
        %488 = vmatpush1.bf16.msra.mxu0 0
        %489 = vmatprep.subr.bf16.mxu0 0
        %490 = vmatpush1.bf16.msra.mxu0 0
        %491 = vmatprep.subr.bf16.mxu0 0
        %492 = vmatpush1.bf16.msra.mxu0 0
        %493 = vmatprep.subr.bf16.mxu0 0
        %494 = vmatpush1.bf16.msra.mxu0 0
        %495 = vmatprep.subr.bf16.mxu0 0
        %496 = vmatpush1.bf16.msra.mxu0 0
        %497 = vmatprep.subr.bf16.mxu0 0
        %498 = vmatpush1.bf16.msra.mxu0 0
        %499 = vmatprep.subr.bf16.mxu0 0
        %500 = vmatpush1.bf16.msra.mxu0 %v483
        %501 = vmatprep.subr.bf16.mxu0 0
        %502 = vmatpush2.bf16.msra.mxu0 0
        %503 = vmatprep.subr.bf16.mxu0 0
        %504 = vmatpush2.bf16.msra.mxu0 0
        %505 = vmatprep.subr.bf16.mxu0 0
        %506 = vmatpush2.bf16.msra.mxu0 0
        %507 = vmatprep.subr.bf16.mxu0 0
        %508 = vmatpush2.bf16.msra.mxu0 0
        %509 = vmatprep.subr.bf16.mxu0 0
        %510 = vmatpush2.bf16.msra.mxu0 0
        %511 = vmatprep.subr.bf16.mxu0 0
        %512 = vmatpush2.bf16.msra.mxu0 0
        %513 = vmatprep.subr.bf16.mxu0 0
        %514 = vmatpush2.bf16.msra.mxu0 0
        %515 = vmatprep.subr.bf16.mxu0 0
        %516 = vmatpush2.bf16.msra.mxu0 0
        %517 = vmatprep.mubr.bf16.mxu0 0
        %518 = vmatmul.mubr.bf16.gmra.mxu0 %v480
        %v519 = vpop.f32.mrf.mxu0
        %v520 = vadd.f32 0.0, %v519
        %v521 = vpop.f32.mrf.mxu0
        %v522 = vpop.f32.mrf.mxu0
        %v523 = vadd.f32 0.0, %v522
        %v524 = vpop.f32.mrf.mxu0
        %525 = vdwg.mxu0
        %v526 = vadd.f32 %v449, %v520
        %v527 = vadd.f32 %v450, %v523
        %v528 = vld [vmem:[%s390] sm:$0xf]
        %v529 = vld [vmem:[%s390 + $0x4] sm:$0xf]
        %v530 = vld [vmem:[%s390 + $0x8] sm:$0x1]
        %s531 = sadd.s32 %s327, 3
        %s532 = smul.addr %s531, 2
        %s533 = scalar_lea.vmem %s1, %s532
        %v534 = vld [vmem:[%s533] sm:$0x3]
        %v538 = vunpack.c.l.b16 %v528
        %v539 = vunpack.c.l.b16 %v529
        %v540 = vunpack.c.l.b16 %v530
        %v541 = vpack.c.b16 %v539, %v538
        %v542 = vpack.c.b16 %v540, %v540
        %v544 = vshrl.u32 %v541, 16
        %v546 = vshll.u32 %v541, 16
        %v548 = vrot.slane %v546, 1
        %v549 = vor.u32 %v544, %v548
        %v551 = vshll.u32 %v542, 16
        %v553 = vrot.slane %v551, 1
        %v554 = vsel %vm466, %v549, %v553
        %v556 = vsel %vm336, %v554, 0
        %v559 = vand.u32 %v534, %v343
        %561 = vmatprep.subr.bf16.mxu0 0
        %562 = vmatpush1.bf16.msra.mxu0 0
        %563 = vmatprep.subr.bf16.mxu0 0
        %564 = vmatpush1.bf16.msra.mxu0 0
        %565 = vmatprep.subr.bf16.mxu0 0
        %566 = vmatpush1.bf16.msra.mxu0 0
        %567 = vmatprep.subr.bf16.mxu0 0
        %568 = vmatpush1.bf16.msra.mxu0 0
        %569 = vmatprep.subr.bf16.mxu0 0
        %570 = vmatpush1.bf16.msra.mxu0 0
        %571 = vmatprep.subr.bf16.mxu0 0
        %572 = vmatpush1.bf16.msra.mxu0 0
        %573 = vmatprep.subr.bf16.mxu0 0
        %574 = vmatpush1.bf16.msra.mxu0 0
        %575 = vmatprep.subr.bf16.mxu0 0
        %576 = vmatpush1.bf16.msra.mxu0 %v559
        %577 = vmatprep.subr.bf16.mxu0 0
        %578 = vmatpush2.bf16.msra.mxu0 0
        %579 = vmatprep.subr.bf16.mxu0 0
        %580 = vmatpush2.bf16.msra.mxu0 0
        %581 = vmatprep.subr.bf16.mxu0 0
        %582 = vmatpush2.bf16.msra.mxu0 0
        %583 = vmatprep.subr.bf16.mxu0 0
        %584 = vmatpush2.bf16.msra.mxu0 0
        %585 = vmatprep.subr.bf16.mxu0 0
        %586 = vmatpush2.bf16.msra.mxu0 0
        %587 = vmatprep.subr.bf16.mxu0 0
        %588 = vmatpush2.bf16.msra.mxu0 0
        %589 = vmatprep.subr.bf16.mxu0 0
        %590 = vmatpush2.bf16.msra.mxu0 0
        %591 = vmatprep.subr.bf16.mxu0 0
        %592 = vmatpush2.bf16.msra.mxu0 0
        %593 = vmatprep.mubr.bf16.mxu0 0
        %594 = vmatmul.mubr.bf16.gmra.mxu0 %v556
        %v595 = vpop.f32.mrf.mxu0
        %v596 = vadd.f32 0.0, %v595
        %v597 = vpop.f32.mrf.mxu0
        %v598 = vpop.f32.mrf.mxu0
        %v599 = vadd.f32 0.0, %v598
        %v600 = vpop.f32.mrf.mxu0
        %601 = vdwg.mxu0
        %v602 = vadd.f32 %v526, %v596
        %v603 = vadd.f32 %v527, %v599
        %v604 = vld [vmem:[%s281] sm:$0xe]
        %s605 = sadd.s32 %s327, 4
        %s606 = smul.addr %s605, 2
        %s607 = scalar_lea.vmem %s1, %s606
        %v608 = vld [vmem:[%s607] sm:$0x3]
        %v610 = vunpack.c.l.b16 %v604
        %v611 = vpack.c.b16 %v462, %v610
        %vm612 = vcmask 1046528
        %v613 = vrot.slane %v611, 1
        %v614 = vrot.slane %v465, 1
        %v615 = vsel %vm612, %v613, %v614
        %v617 = vsel %vm336, %v615, 0
        %v620 = vand.u32 %v608, %v343
        %622 = vmatprep.subr.bf16.mxu0 0
        %623 = vmatpush1.bf16.msra.mxu0 0
        %624 = vmatprep.subr.bf16.mxu0 0
        %625 = vmatpush1.bf16.msra.mxu0 0
        %626 = vmatprep.subr.bf16.mxu0 0
        %627 = vmatpush1.bf16.msra.mxu0 0
        %628 = vmatprep.subr.bf16.mxu0 0
        %629 = vmatpush1.bf16.msra.mxu0 0
        %630 = vmatprep.subr.bf16.mxu0 0
        %631 = vmatpush1.bf16.msra.mxu0 0
        %632 = vmatprep.subr.bf16.mxu0 0
        %633 = vmatpush1.bf16.msra.mxu0 0
        %634 = vmatprep.subr.bf16.mxu0 0
        %635 = vmatpush1.bf16.msra.mxu0 0
        %636 = vmatprep.subr.bf16.mxu0 0
        %637 = vmatpush1.bf16.msra.mxu0 %v620
        %638 = vmatprep.subr.bf16.mxu0 0
        %639 = vmatpush2.bf16.msra.mxu0 0
        %640 = vmatprep.subr.bf16.mxu0 0
        %641 = vmatpush2.bf16.msra.mxu0 0
        %642 = vmatprep.subr.bf16.mxu0 0
        %643 = vmatpush2.bf16.msra.mxu0 0
        %644 = vmatprep.subr.bf16.mxu0 0
        %645 = vmatpush2.bf16.msra.mxu0 0
        %646 = vmatprep.subr.bf16.mxu0 0
        %647 = vmatpush2.bf16.msra.mxu0 0
        %648 = vmatprep.subr.bf16.mxu0 0
        %649 = vmatpush2.bf16.msra.mxu0 0
        %650 = vmatprep.subr.bf16.mxu0 0
        %651 = vmatpush2.bf16.msra.mxu0 0
        %652 = vmatprep.subr.bf16.mxu0 0
        %653 = vmatpush2.bf16.msra.mxu0 0
        %654 = vmatprep.mubr.bf16.mxu0 0
        %655 = vmatmul.mubr.bf16.gmra.mxu0 %v617
        %v656 = vpop.f32.mrf.mxu0
        %v657 = vadd.f32 0.0, %v656
        %v658 = vpop.f32.mrf.mxu0
        %v659 = vpop.f32.mrf.mxu0
        %v660 = vadd.f32 0.0, %v659
        %v661 = vpop.f32.mrf.mxu0
        %662 = vdwg.mxu0
        %v663 = vadd.f32 %v602, %v657
        %v664 = vadd.f32 %v603, %v660
        %v665 = vld [vmem:[%s390] sm:$0xe]
        %s666 = sadd.s32 %s327, 5
        %s667 = smul.addr %s666, 2
        %s668 = scalar_lea.vmem %s1, %s667
        %v669 = vld [vmem:[%s668] sm:$0x3]
        %v671 = vunpack.c.l.b16 %v665
        %v672 = vpack.c.b16 %v539, %v671
        %v673 = vrot.slane %v672, 1
        %v674 = vrot.slane %v542, 1
        %v675 = vsel %vm612, %v673, %v674
        %v677 = vsel %vm336, %v675, 0
        %v680 = vand.u32 %v669, %v343
        %682 = vmatprep.subr.bf16.mxu0 0
        %683 = vmatpush1.bf16.msra.mxu0 0
        %684 = vmatprep.subr.bf16.mxu0 0
        %685 = vmatpush1.bf16.msra.mxu0 0
        %686 = vmatprep.subr.bf16.mxu0 0
        %687 = vmatpush1.bf16.msra.mxu0 0
        %688 = vmatprep.subr.bf16.mxu0 0
        %689 = vmatpush1.bf16.msra.mxu0 0
        %690 = vmatprep.subr.bf16.mxu0 0
        %691 = vmatpush1.bf16.msra.mxu0 0
        %692 = vmatprep.subr.bf16.mxu0 0
        %693 = vmatpush1.bf16.msra.mxu0 0
        %694 = vmatprep.subr.bf16.mxu0 0
        %695 = vmatpush1.bf16.msra.mxu0 0
        %696 = vmatprep.subr.bf16.mxu0 0
        %697 = vmatpush1.bf16.msra.mxu0 %v680
        %698 = vmatprep.subr.bf16.mxu0 0
        %699 = vmatpush2.bf16.msra.mxu0 0
        %700 = vmatprep.subr.bf16.mxu0 0
        %701 = vmatpush2.bf16.msra.mxu0 0
        %702 = vmatprep.subr.bf16.mxu0 0
        %703 = vmatpush2.bf16.msra.mxu0 0
        %704 = vmatprep.subr.bf16.mxu0 0
        %705 = vmatpush2.bf16.msra.mxu0 0
        %706 = vmatprep.subr.bf16.mxu0 0
        %707 = vmatpush2.bf16.msra.mxu0 0
        %708 = vmatprep.subr.bf16.mxu0 0
        %709 = vmatpush2.bf16.msra.mxu0 0
        %710 = vmatprep.subr.bf16.mxu0 0
        %711 = vmatpush2.bf16.msra.mxu0 0
        %712 = vmatprep.subr.bf16.mxu0 0
        %713 = vmatpush2.bf16.msra.mxu0 0
        %714 = vmatprep.mubr.bf16.mxu0 0
        %715 = vmatmul.mubr.bf16.gmra.mxu0 %v677
        %v716 = vpop.f32.mrf.mxu0
        %v717 = vadd.f32 0.0, %v716
        %v718 = vpop.f32.mrf.mxu0
        %v719 = vpop.f32.mrf.mxu0
        %v720 = vadd.f32 0.0, %v719
        %v721 = vpop.f32.mrf.mxu0
        %722 = vdwg.mxu0
        %v723 = vadd.f32 %v663, %v717
        %v724 = vadd.f32 %v664, %v720
        %v725 = vld [vmem:[%s281 + $0x8] sm:$0x3]
        %s726 = sadd.s32 %s327, 6
        %s727 = smul.addr %s726, 2
        %s728 = scalar_lea.vmem %s1, %s727
        %v729 = vld [vmem:[%s728] sm:$0x3]
        %v731 = vunpack.c.l.b16 %v725
        %v732 = vpack.c.b16 %v731, %v731
        %vm733 = vsmask.f32 6400
        %v735 = vshrl.u32 %v611, 16
        %v737 = vrot.slane %v735, 1
        %v738 = vshll.u32 %v611, 16
        %v740 = vrot.slane %v738, 2
        %v741 = vor.u32 %v737, %v740
        %v743 = vshrl.u32 %v732, 16
        %v745 = vrot.slane %v743, 1
        %v746 = vshll.u32 %v732, 16
        %v748 = vrot.slane %v746, 2
        %v749 = vor.u32 %v745, %v748
        %v750 = vsel %vm733, %v741, %v749
        %v752 = vsel %vm336, %v750, 0
        %v755 = vand.u32 %v729, %v343
        %757 = vmatprep.subr.bf16.mxu0 0
        %758 = vmatpush1.bf16.msra.mxu0 0
        %759 = vmatprep.subr.bf16.mxu0 0
        %760 = vmatpush1.bf16.msra.mxu0 0
        %761 = vmatprep.subr.bf16.mxu0 0
        %762 = vmatpush1.bf16.msra.mxu0 0
        %763 = vmatprep.subr.bf16.mxu0 0
        %764 = vmatpush1.bf16.msra.mxu0 0
        %765 = vmatprep.subr.bf16.mxu0 0
        %766 = vmatpush1.bf16.msra.mxu0 0
        %767 = vmatprep.subr.bf16.mxu0 0
        %768 = vmatpush1.bf16.msra.mxu0 0
        %769 = vmatprep.subr.bf16.mxu0 0
        %770 = vmatpush1.bf16.msra.mxu0 0
        %771 = vmatprep.subr.bf16.mxu0 0
        %772 = vmatpush1.bf16.msra.mxu0 %v755
        %773 = vmatprep.subr.bf16.mxu0 0
        %774 = vmatpush2.bf16.msra.mxu0 0
        %775 = vmatprep.subr.bf16.mxu0 0
        %776 = vmatpush2.bf16.msra.mxu0 0
        %777 = vmatprep.subr.bf16.mxu0 0
        %778 = vmatpush2.bf16.msra.mxu0 0
        %779 = vmatprep.subr.bf16.mxu0 0
        %780 = vmatpush2.bf16.msra.mxu0 0
        %781 = vmatprep.subr.bf16.mxu0 0
        %782 = vmatpush2.bf16.msra.mxu0 0
        %783 = vmatprep.subr.bf16.mxu0 0
        %784 = vmatpush2.bf16.msra.mxu0 0
        %785 = vmatprep.subr.bf16.mxu0 0
        %786 = vmatpush2.bf16.msra.mxu0 0
        %787 = vmatprep.subr.bf16.mxu0 0
        %788 = vmatpush2.bf16.msra.mxu0 0
        %789 = vmatprep.mubr.bf16.mxu0 0
        %790 = vmatmul.mubr.bf16.gmra.mxu0 %v752
        %v791 = vpop.f32.mrf.mxu0
        %v792 = vadd.f32 0.0, %v791
        %v793 = vpop.f32.mrf.mxu0
        %v794 = vpop.f32.mrf.mxu0
        %v795 = vadd.f32 0.0, %v794
        %v796 = vpop.f32.mrf.mxu0
        %797 = vdwg.mxu0
        %v798 = vadd.f32 %v723, %v792
        %v799 = vadd.f32 %v724, %v795
        %vm800 = vcmask 523264
        %801 = vst.msk [vmem:[#allocation2] sm:$0xff] %vm800, %v798
        %802 = vst.msk [vmem:[#allocation2 + $0x8] sm:$0xff] %vm800, %v799
        %p803 = scmp.eq.s32.totalorder %s29, 6
        // Predicated region
        $region74: #{tpu_custom_call.1} parent=64 // pred_check
          %p804 = pneg %p803
        $region75: #{tpu_custom_call.1} parent=64 // pred_check_branch
          %806 = sbr.rel (%p804) target = $region77
        $region76: #{tpu_custom_call.1} parent=64 // pred_region
          %v807 = vld [vmem:[#allocation2] sm:$0xff]
          %v808 = vld [vmem:[#allocation2 + $0x8] sm:$0xff]
          %v809 = vpack.c.bf16 %v808, %v807
          %v811 = vunpack.c.l.b16 %v809
          %v812 = vunpack.c.h.b16 %v809
          %v813 = vpack.c.b16 %v811, %v811
          %v814 = vpack.c.b16 %v812, %v812
          %vm817 = vcmask 519168
          %818 = vst.msk [vmem:[%s299] sm:$0xf] %vm817, %v813
          %819 = vst.msk [vmem:[%s299 + $0x4] sm:$0xf] %vm817, %v814
          %v820 = vsel %vm800, %v807, 0.0
          %v821 = vsel %vm800, %v808, 0.0
          %v822 = vadd.f32 %v820, %v821
          %v823 = vrot.slane %v822, 4
          %v824 = vadd.f32 %v822, %v823
          %v825 = vrot.slane %v824, 2
          %v826 = vadd.f32 %v824, %v825
          %v827 = vrot.slane %v826, 1
          %v828 = vadd.f32 %v826, %v827
          %vm829 = vcmask 516096
          %830 = vst.msk [vmem:[%s305] sm:$0x1] %vm829, %v828
          %v831 = vmul.f32 %v807, %v807
          %v832 = vmul.f32 %v808, %v808
          %v833 = vsel %vm800, %v831, 0.0
          %v834 = vsel %vm800, %v832, 0.0
          %v835 = vadd.f32 %v833, %v834
          %v836 = vrot.slane %v835, 4
          %v837 = vadd.f32 %v835, %v836
          %v838 = vrot.slane %v837, 2
          %v839 = vadd.f32 %v837, %v838
          %v840 = vrot.slane %v839, 1
          %v841 = vadd.f32 %v839, %v840
          %842 = vst.msk [vmem:[%s311] sm:$0x1] %vm829, %v841
        $region77: #{tpu_custom_call.1} parent=64 // pred_fallthru
          _
        %s843 = sand.u32 %s104, 1
        %s844 = scalar_lea.sflag [#allocation5], %s843
        %s845 = sand.u32 %s104, 1
        %s846 = smul.addr %s845, 8
        %s847 = scalar_lea.vmem [#allocation4], %s846
        %s848 = sand.u32 %s22, 1
        %s849 = scalar_lea.sflag [#allocation7], %s848
        %s850 = sand.u32 %s132, 1
        %s851 = scalar_lea.vmem [#allocation6], %s850
        %s852 = sand.u32 %s22, 1
        %s853 = scalar_lea.sflag [#allocation7], %s852
        %s854 = sand.u32 %s160, 1
        %s855 = scalar_lea.vmem [#allocation8], %s854
        // Predicated region
        $region78: #{tpu_custom_call.1} parent=64 // pred_check
          %p856 = pneg %p114
        $region79: #{tpu_custom_call.1} parent=64 // pred_check_branch
          %858 = sbr.rel (%p856) target = $region81
        $region80: #{tpu_custom_call.1} parent=64 // pred_region
          %s860 = ssub.s32 128, 128
          %861 = vsyncadd %s844, %s860
          %s862 = smul.addr %s28, 2
          %s863 = smul.addr %s27, 32
          %s864 = sadd.s32 %s862, %s863
          %s865 = smul.addr %s864, 64
          %s866 = scalar_lea.hbm %s2, %s865
          %s867 = sshll.u32 %s847, 4
          %s868 = int_to_ptr.vmem [resolvable:$true] %s867
          %873 = dma.vmem_to_hbm [thread:$0]  %s868, 128, %s866, %s844, 64, 64, 4
        $region81: #{tpu_custom_call.1} parent=64 // pred_fallthru
          _
        // Predicated region
        $region82: #{tpu_custom_call.1} parent=64 // pred_check
          %p874 = pneg %p142
        $region83: #{tpu_custom_call.1} parent=64 // pred_check_branch
          %876 = sbr.rel (%p874) target = $region85
        $region84: #{tpu_custom_call.1} parent=64 // pred_region
          %s878 = ssub.s32 16, 16
          %879 = vsyncadd %s849, %s878
          %s880 = smul.addr %s27, 16
          %s881 = sadd.s32 %s28, %s880
          %s882 = smul.addr %s881, 16
          %s883 = scalar_lea.hbm %s3, %s882
          %s885 = sshll.u32 %s851, 4
          %s886 = int_to_ptr.vmem [resolvable:$true] %s885
          %888 = dma.vmem_to_hbm [thread:$0]  %s886, 16, %s883, %s849
        $region85: #{tpu_custom_call.1} parent=64 // pred_fallthru
          _
        // Predicated region
        $region86: #{tpu_custom_call.1} parent=64 // pred_check
          %p889 = pneg %p170
        $region87: #{tpu_custom_call.1} parent=64 // pred_check_branch
          %891 = sbr.rel (%p889) target = $region89
        $region88: #{tpu_custom_call.1} parent=64 // pred_region
          %s893 = ssub.s32 16, 16
          %894 = vsyncadd %s853, %s893
          %s895 = smul.addr %s27, 16
          %s896 = sadd.s32 %s28, %s895
          %s897 = smul.addr %s896, 16
          %s898 = scalar_lea.hbm %s4, %s897
          %s900 = sshll.u32 %s855, 4
          %s901 = int_to_ptr.vmem [resolvable:$true] %s900
          %903 = dma.vmem_to_hbm [thread:$0]  %s901, 16, %s898, %s853
        $region89: #{tpu_custom_call.1} parent=64 // pred_fallthru
          _
      $region65: #{tpu_custom_call.1} parent=5 // pred_fallthru
        _
      %p904 = scmp.le.s32.totalorder 2, %s17
      // Predicated region
      $region90: #{tpu_custom_call.1} parent=5 // pred_check
        %p905 = pneg %p904
      $region91: #{tpu_custom_call.1} parent=5 // pred_check_branch
        %907 = sbr.rel (%p905) target = $region93
      $region92: #{tpu_custom_call.1} parent=5 // pred_region
        %s908 = ssub.s32 %s17, 2
        // Predicated region
        $region94: #{tpu_custom_call.1} parent=92 // pred_check
          %p909 = pneg %p120
        $region95: #{tpu_custom_call.1} parent=92 // pred_check_branch
          %911 = sbr.rel (%p909) target = $region97
        $region96: #{tpu_custom_call.1} parent=92 // pred_region
          %s912 = sand.u32 %s105, 1
          %s913 = scalar_lea.sflag [#allocation5], %s912
          %s914 = sand.u32 %s105, 1
          %s915 = smul.addr %s914, 8
          %s916 = scalar_lea.vmem [#allocation4], %s915
          %917 = dma.done %s913, 128
        $region97: #{tpu_custom_call.1} parent=92 // pred_fallthru
          _
        // Predicated region
        $region98: #{tpu_custom_call.1} parent=92 // pred_check
          %p918 = pneg %p148
        $region99: #{tpu_custom_call.1} parent=92 // pred_check_branch
          %920 = sbr.rel (%p918) target = $region101
        $region100: #{tpu_custom_call.1} parent=92 // pred_region
          %s921 = sand.u32 %s23, 1
          %s922 = scalar_lea.sflag [#allocation7], %s921
          %s923 = sand.u32 %s133, 1
          %s924 = scalar_lea.vmem [#allocation6], %s923
          %925 = dma.done %s922, 16
        $region101: #{tpu_custom_call.1} parent=92 // pred_fallthru
          _
        // Predicated region
        $region102: #{tpu_custom_call.1} parent=92 // pred_check
          %p926 = pneg %p176
        $region103: #{tpu_custom_call.1} parent=92 // pred_check_branch
          %928 = sbr.rel (%p926) target = $region105
        $region104: #{tpu_custom_call.1} parent=92 // pred_region
          %s929 = sand.u32 %s23, 1
          %s930 = scalar_lea.sflag [#allocation7], %s929
          %s931 = sand.u32 %s161, 1
          %s932 = scalar_lea.vmem [#allocation8], %s931
          %933 = dma.done %s930, 16
        $region105: #{tpu_custom_call.1} parent=92 // pred_fallthru
          _
      $region93: #{tpu_custom_call.1} parent=5 // pred_fallthru
        _
    $region6: #{tpu_custom_call.1} parent=1 // loop_footer
      %s21 = sadd.s32 1, %s17
    $region7: #{tpu_custom_call.1} parent=1 // loop_footer_branch
      %16 = sbr.rel target = $region3
    $region8: #{tpu_custom_call.1} parent=1 // loop_exit
      _
    %934 = vsyncpa [#allocation5], 1
    %s935 = scalar_lea.sflag [#allocation5], 1
    %936 = vsyncpa %s935, 1
    %937 = vsyncpa [#allocation7], 1
    %s938 = scalar_lea.sflag [#allocation7], 1
    %939 = vsyncpa %s938, 1

</llo_original>
